<compile_context>
chip_gen: v7x
topology: tpu7x:2x2x1
jax: 0.10.0
libtpu: 0.0.40
codegen_flags: <defaults>
</compile_context>

<pallas_src>
import jax
import jax.numpy as jnp
from jax import lax
from jax.experimental import pallas as pl
from jax.experimental.pallas import tpu as pltpu


def _mixmil_kernel(x_ref, w_ref, b_ref, alpha_ref, yprobs_ref, yprob_ref):
    # x_ref: (N, D), w_ref: (O, D), b_ref: (1, O), alpha_ref: (1, 1)
    # Linear: y = x @ W.T + b, contracting on D (no host-side transpose of W).
    y = lax.dot_general(
        x_ref[...], w_ref[...],
        dimension_numbers=(((1,), (1,)), ((), ())),
        preferred_element_type=jnp.float32,
    )
    y = y + b_ref[...]                                  # broadcast bias (1, O)
    yprobs_ref[...] = y.astype(yprobs_ref.dtype)

    # Mixture pooling: sigmoid(alpha) * max(y) + (1 - sigmoid(alpha)) * mean(y).
    # Everything stays (1,1)-shaped in the vector domain for clean lowering.
    sig_alpha = 1.0 / (1.0 + jnp.exp(-alpha_ref[...]))                          # (1, 1)
    y_max = jnp.max(jnp.max(y, axis=1, keepdims=True), axis=0, keepdims=True)   # (1, 1)
    y_sum = jnp.sum(jnp.sum(y, axis=1, keepdims=True), axis=0, keepdims=True)   # (1, 1)
    inv_n = 1.0 / float(y.shape[0] * y.shape[1])
    y_mean = y_sum * inv_n
    yprob_ref[...] = (sig_alpha * y_max + (1.0 - sig_alpha) * y_mean).astype(yprob_ref.dtype)


def mixmil_forward_batched(x, weight, bias, alpha):
    """Batched mixmil forward.

    x:      [B, N, D]  (B independent bags of N instances each)
    weight: [O, D]     (nn.Linear weight, NOT transposed)
    bias:   [O]
    alpha:  scalar
    Returns (Y_prob [B], Y_probs [B, N, O]) — per-bag semantics identical to the
    PyTorch module's forward on each bag.
    """
    B, N, D = x.shape
    O = weight.shape[0]
    b2 = bias.reshape(1, O).astype(jnp.float32)
    a2 = jnp.asarray(alpha, jnp.float32).reshape(1, 1)

    cost = pl.CostEstimate(
        flops=2 * B * N * D * O + 8 * B * N * O,
        transcendentals=B,
        bytes_accessed=4 * (B * N * D + O * D + O + 1 + B * N * O + B),
    )

    yprobs, yprob = pl.pallas_call(
        _mixmil_kernel,
        out_shape=(
            jax.ShapeDtypeStruct((B, N, O), jnp.float32),
            jax.ShapeDtypeStruct((B, 1, 1), jnp.float32),
        ),
        grid=(B,),
        in_specs=[
            pl.BlockSpec((None, N, D), lambda b: (b, 0, 0)),   # x: one bag per grid step
            pl.BlockSpec((O, D), lambda b: (0, 0)),            # weight: resident in VMEM
            pl.BlockSpec((1, O), lambda b: (0, 0)),            # bias:   resident in VMEM
            pl.BlockSpec((1, 1), lambda b: (0, 0)),            # alpha:  resident in VMEM
        ],
        out_specs=(
            pl.BlockSpec((None, N, O), lambda b: (b, 0, 0)),   # Y_probs per bag
            pl.BlockSpec((None, 1, 1), lambda b: (b, 0, 0)),   # Y_prob  per bag
        ),
        compiler_params=pltpu.CompilerParams(
            dimension_semantics=("parallel",),                 # bags are independent
        ),
        cost_estimate=cost,
    )(x.astype(jnp.float32), weight.astype(jnp.float32), b2, a2)

    return yprob.reshape(B), yprobs


def mixmil_forward(x, weight, bias, alpha):
    """Single-bag forward matching the PyTorch module: x [N, D] -> (scalar, [N, O])."""
    y_prob, y_probs = mixmil_forward_batched(x[None], weight, bias, alpha)
    return y_prob[0], y_probs[0]


if __name__ == "__main__":
    # Small shapes implied by the module: B bags, each N instances of D features,
    # classified to O outputs.
    B, N, D, O = 4, 8, 32, 4

    key = jax.random.PRNGKey(0)
    kx, kw, kb = jax.random.split(key, 3)

    x = jax.random.normal(kx, (B, N, D), dtype=jnp.float32)
    # Mimic nn.Linear's uniform(-1/sqrt(D), 1/sqrt(D)) init, deterministically.
    bound = 1.0 / jnp.sqrt(jnp.float32(D))
    weight = jax.random.uniform(kw, (O, D), minval=-bound, maxval=bound, dtype=jnp.float32)
    bias = jax.random.uniform(kb, (O,), minval=-bound, maxval=bound, dtype=jnp.float32)
    alpha = jnp.float32(0.5)   # nn.Parameter(torch.tensor(0.5))

    y_prob, y_probs = mixmil_forward_batched(x, weight, bias, alpha)
    jax.block_until_ready((y_prob, y_probs))

    # Pure-JAX reference (mirrors the PyTorch forward, applied per bag).
    ref_probs = jnp.einsum("bnd,od->bno", x, weight) + bias
    sig_a = jax.nn.sigmoid(alpha)
    ref_prob = sig_a * jnp.max(ref_probs, axis=(1, 2)) + (1.0 - sig_a) * jnp.mean(ref_probs, axis=(1, 2))

    assert y_probs.shape == (B, N, O)
    assert y_prob.shape == (B,)
    assert jnp.allclose(y_probs, ref_probs, atol=1e-5, rtol=1e-5)
    assert jnp.allclose(y_prob, ref_prob, atol=1e-5, rtol=1e-5)

    print("KERNEL_OK")
</pallas_src>

<mosaic_0001>
module attributes {stable_mosaic.version = 11 : i64} {
  func.func @_mixmil_kernel(%arg0: i32, %arg1: memref<1x8x32xf32, #tpu.memory_space<vmem>>, %arg2: memref<4x32xf32, #tpu.memory_space<vmem>>, %arg3: memref<1x4xf32, #tpu.memory_space<vmem>>, %arg4: memref<1x1xf32, #tpu.memory_space<vmem>>, %arg5: memref<1x8x4xf32, #tpu.memory_space<vmem>>, %arg6: memref<1x1x1xf32, #tpu.memory_space<vmem>>) attributes {dimension_semantics = [#tpu.dimension_semantics<parallel>], iteration_bounds = array<i64: 4>, scalar_prefetch = 0 : i64, scratch_operands = 0 : i64, tpu.core_type = #tpu.core_type<tc>, window_params = [{transform_indices = @transform_0, window_bounds = array<i64: 1, 8, 32>}, {pipeline_mode = #tpu.pipeline_mode<synchronous>, transform_indices = @transform_1, window_bounds = array<i64: 4, 32>}, {pipeline_mode = #tpu.pipeline_mode<synchronous>, transform_indices = @transform_2, window_bounds = array<i64: 1, 4>}, {pipeline_mode = #tpu.pipeline_mode<synchronous>, transform_indices = @transform_3, window_bounds = array<i64: 1, 1>}, {transform_indices = @transform_4, window_bounds = array<i64: 1, 8, 4>}, {transform_indices = @transform_5, window_bounds = array<i64: 1, 1, 1>}]} {
    %c0 = arith.constant 0 : index
    %c0_0 = arith.constant 0 : index
    %c0_1 = arith.constant 0 : index
    %0 = vector.load %arg1[%c0, %c0_0, %c0_1] : memref<1x8x32xf32, #tpu.memory_space<vmem>>, vector<1x8x32xf32>
    %1 = vector.shape_cast %0 : vector<1x8x32xf32> to vector<8x32xf32>
    %c0_2 = arith.constant 0 : index
    %c0_3 = arith.constant 0 : index
    %2 = vector.load %arg2[%c0_2, %c0_3] : memref<4x32xf32, #tpu.memory_space<vmem>>, vector<4x32xf32>
    %cst = arith.constant dense<0.000000e+00> : vector<8x4xf32>
    %3 = tpu.matmul %1, %2, %cst {dimension_numbers = #tpu.dot_dimension_numbers<[1], [1], [0], [0], [0, 0, 1, 0], [], []>} : vector<8x32xf32>, vector<4x32xf32>, vector<8x4xf32> -> vector<8x4xf32>
    %c0_4 = arith.constant 0 : index
    %c0_5 = arith.constant 0 : index
    %4 = vector.load %arg3[%c0_4, %c0_5] : memref<1x4xf32, #tpu.memory_space<vmem>>, vector<1x4xf32>
    %5 = vector.broadcast %4 : vector<1x4xf32> to vector<8x4xf32>
    %6 = arith.addf %3, %5 : vector<8x4xf32>
    %c0_6 = arith.constant 0 : index
    %c0_7 = arith.constant 0 : index
    %c0_8 = arith.constant 0 : index
    %7 = vector.load %arg5[%c0_6, %c0_7, %c0_8] : memref<1x8x4xf32, #tpu.memory_space<vmem>>, vector<1x8x4xf32>
    %8 = vector.shape_cast %7 : vector<1x8x4xf32> to vector<8x4xf32>
    %9 = vector.shape_cast %6 : vector<8x4xf32> to vector<1x8x4xf32>
    tpu.vector_store %arg5[%c0_6, %c0_7, %c0_8], %9 {strides = array<i32>} : memref<1x8x4xf32, #tpu.memory_space<vmem>>, vector<1x8x4xf32>,
    %c0_9 = arith.constant 0 : index
    %c0_10 = arith.constant 0 : index
    %10 = vector.load %arg4[%c0_9, %c0_10] : memref<1x1xf32, #tpu.memory_space<vmem>>, vector<1x1xf32>
    %cst_11 = arith.constant 0.000000e+00 : f32
    %11 = vector.broadcast %cst_11 : f32 to vector<1x1xf32>
    %12 = arith.subf %11, %10 : vector<1x1xf32>
    %13 = math.exp %12 : vector<1x1xf32>
    %cst_12 = arith.constant 1.000000e+00 : f32
    %14 = vector.broadcast %cst_12 : f32 to vector<1x1xf32>
    %15 = arith.addf %14, %13 : vector<1x1xf32>
    %cst_13 = arith.constant 1.000000e+00 : f32
    %16 = vector.broadcast %cst_13 : f32 to vector<1x1xf32>
    %17 = arith.divf %16, %15 : vector<1x1xf32>
    %cst_14 = arith.constant dense<0xFF800000> : vector<8xf32>
    %18 = vector.multi_reduction <maximumf>, %6, %cst_14 [1] : vector<8x4xf32> to vector<8xf32>
    %19 = vector.shape_cast %18 : vector<8xf32> to vector<8x1xf32>
    %cst_15 = arith.constant dense<0xFF800000> : vector<1xf32>
    %20 = vector.multi_reduction <maximumf>, %19, %cst_15 [0] : vector<8x1xf32> to vector<1xf32>
    %21 = vector.shape_cast %20 : vector<1xf32> to vector<1x1xf32>
    %cst_16 = arith.constant dense<0.000000e+00> : vector<8xf32>
    %22 = vector.multi_reduction <add>, %6, %cst_16 [1] : vector<8x4xf32> to vector<8xf32>
    %23 = vector.shape_cast %22 : vector<8xf32> to vector<8x1xf32>
    %cst_17 = arith.constant dense<0.000000e+00> : vector<1xf32>
    %24 = vector.multi_reduction <add>, %23, %cst_17 [0] : vector<8x1xf32> to vector<1xf32>
    %25 = vector.shape_cast %24 : vector<1xf32> to vector<1x1xf32>
    %cst_18 = arith.constant 3.125000e-02 : f32
    %26 = vector.broadcast %cst_18 : f32 to vector<1x1xf32>
    %27 = arith.mulf %25, %26 : vector<1x1xf32>
    %28 = arith.mulf %17, %21 : vector<1x1xf32>
    %cst_19 = arith.constant 1.000000e+00 : f32
    %29 = vector.broadcast %cst_19 : f32 to vector<1x1xf32>
    %30 = arith.subf %29, %17 : vector<1x1xf32>
    %31 = arith.mulf %30, %27 : vector<1x1xf32>
    %32 = arith.addf %28, %31 : vector<1x1xf32>
    %c0_20 = arith.constant 0 : index
    %c0_21 = arith.constant 0 : index
    %c0_22 = arith.constant 0 : index
    %33 = vector.load %arg6[%c0_20, %c0_21, %c0_22] : memref<1x1x1xf32, #tpu.memory_space<vmem>>, vector<1x1x1xf32>
    %34 = vector.shape_cast %33 : vector<1x1x1xf32> to vector<1x1xf32>
    %35 = vector.shape_cast %32 : vector<1x1xf32> to vector<1x1x1xf32>
    tpu.vector_store %arg6[%c0_20, %c0_21, %c0_22], %35 {strides = array<i32>} : memref<1x1x1xf32, #tpu.memory_space<vmem>>, vector<1x1x1xf32>,
    return
  }
  func.func @transform_0(%arg0: i32) -> (i32, i32, i32) {
    %c0_i32 = arith.constant 0 : i32
    %c0_i32_0 = arith.constant 0 : i32
    %c0_i32_1 = arith.constant 0 : i32
    return %arg0, %c0_i32, %c0_i32_0 : i32, i32, i32
  }
  func.func @transform_1(%arg0: i32) -> (i32, i32) {
    %c0_i32 = arith.constant 0 : i32
    %c0_i32_0 = arith.constant 0 : i32
    %c0_i32_1 = arith.constant 0 : i32
    return %c0_i32, %c0_i32_0 : i32, i32
  }
  func.func @transform_2(%arg0: i32) -> (i32, i32) {
    %c0_i32 = arith.constant 0 : i32
    %c0_i32_0 = arith.constant 0 : i32
    %c0_i32_1 = arith.constant 0 : i32
    return %c0_i32, %c0_i32_0 : i32, i32
  }
  func.func @transform_3(%arg0: i32) -> (i32, i32) {
    %c0_i32 = arith.constant 0 : i32
    %c0_i32_0 = arith.constant 0 : i32
    %c0_i32_1 = arith.constant 0 : i32
    return %c0_i32, %c0_i32_0 : i32, i32
  }
  func.func @transform_4(%arg0: i32) -> (i32, i32, i32) {
    %c0_i32 = arith.constant 0 : i32
    %c0_i32_0 = arith.constant 0 : i32
    %c0_i32_1 = arith.constant 0 : i32
    return %arg0, %c0_i32, %c0_i32_0 : i32, i32, i32
  }
  func.func @transform_5(%arg0: i32) -> (i32, i32, i32) {
    %c0_i32 = arith.constant 0 : i32
    %c0_i32_0 = arith.constant 0 : i32
    %c0_i32_1 = arith.constant 0 : i32
    return %arg0, %c0_i32, %c0_i32_0 : i32, i32, i32
  }
}

</mosaic_0001>

<llo_original>
// kernel: tpu_custom_call.1
$region0: #{tpu_custom_call.1}
  #allocation0 [shape = 'u32[]', space=smem, size = 0x4, offset = 0x4, fixed_abs, tag = 'smem constant byte address 0x4 - core index']
  #allocation1 [shape = 'u32[144,128]{1,0:T(1,128)}', space=vmem, size = 0x12000, scoped, tag = 'internal scratch']
  #allocation2 [shape = 'f32[1,1]{1,0:T(1,128)S(1)}', space=vmem, size = 0x200, scoped, tag = 'scoped memory for tpu_custom_call.1']
  %s0 = inlined_call_operand.hbm [shape: f32[4,8,32], index: 0, kind: input, shape index: {}]
  %s1 = inlined_call_operand.vmem [shape: f32[4,32], index: 1, kind: input, shape index: {}]
  %s2 = inlined_call_operand.vmem [shape: f32[1,4], index: 2, kind: input, shape index: {}]
  %s3 = inlined_call_operand.<no memory space> [shape: f32[1,1], index: 3, kind: input, shape index: {}]
  %s4 = inlined_call_operand.vmem [shape: f32[4,8,4], index: 4, kind: output, shape index: {0}]
  %s5 = inlined_call_operand.vmem [shape: f32[4,1,1], index: 5, kind: output, shape index: {1}]
  %6 = xla_tuple %s4, %s5
  %s7 = sld [smem:[#allocation0]]
  $region61: #{tpu_custom_call.1} parent=0
    _
  %s9 = ssub.s32 1, %s7
  %s10 = scalar_select 0, %s9, %s7
  %v11 = vstv %s3
  %12 = vst [vmem:[#allocation2] sm:$0x1] %v11
  $region1: #{tpu_custom_call.1} parent=0
    #allocation3 [shape = 'u8[8192]{0}', space=vmem, size = 0x2000, scoped, tag = 'input window, operand 0']
    #allocation4 [shape = 's32[2]{0}', space=sflag, size = 0x8, scoped, tag = 'scoped memory for tpu_custom_call.1']
    %13 = vsyncpa [#allocation4], 0
    %s14 = scalar_lea.sflag [#allocation4], 1
    %15 = vsyncpa %s14, 0
    loop: start=0, step=1, limit=6
    $region2: #{tpu_custom_call.1} parent=1 // loop_pre_header
      _
    $region3: #{tpu_custom_call.1} parent=1 // loop_header
      %s17 = sphi 0, %s21
      %p18 = scmp.ge.s32.totalorder %s17, 6
      %s27 = sphi 0, %s29
      %s30 = sphi 0, %s27
      %s31 = sphi 0, %s30
      %s47 = sphi 0, %s31
      %s51 = sphi 0, %s51
      %s53 = sphi 0, %s51
      %s54 = sphi 0, %s53
      %s68 = sphi 0, %s54
      %s72 = sphi 0, %s72
      %s74 = sphi 0, %s72
      %s75 = sphi 0, %s74
      %s89 = sphi 0, %s75
      %s93 = sphi 0, %s93
      %s95 = sphi 0, %s93
      %s96 = sphi 0, %s95
      %s110 = sphi 0, %s96
      %s116 = sphi 0, %s118
      %s119 = sphi 0, %s116
      %s120 = sphi 0, %s119
      %s136 = sphi 0, %s120
      %s142 = sphi 0, %s144
      %s145 = sphi 0, %s142
      %s146 = sphi 0, %s145
      %s162 = sphi 0, %s146
    $region4: #{tpu_custom_call.1} parent=1 // loop_header_branch
      %20 = sbr.rel (%p18) target = $region8
    $region5: #{tpu_custom_call.1} parent=1 // loop_body
      %s22 = ssub.s32 %s17, 1
      %s23 = ssub.s32 %s17, 2
      %s24 = sadd.s32 %s17, 1
      %s25 = ssub.s32 %s17, %s24
      %p26 = scmp.eq.s32.totalorder %s25, 0
      %s28 = sadd.s32 %s27, 1
      %s29 = scalar_select %p26, %s27, %s28
      %p32 = pneg %p26
      %p33 = scmp.eq.s32.totalorder %s17, 3
      %p34 = por %p32, %p33
      %p35 = scmp.ne.s32.totalorder %s27, %s30
      %p36 = scmp.eq.s32.totalorder %s17, 0
      %p37 = por %p35, %p36
      %p38 = scmp.ne.s32.totalorder %s27, %s30
      %p39 = scmp.eq.s32.totalorder %s22, 3
      %p40 = por %p38, %p39
      %p41 = scmp.ne.s32.totalorder %s30, %s31
      %p42 = scmp.eq.s32.totalorder %s22, 0
      %p43 = por %p41, %p42
      %p44 = scmp.ne.s32.totalorder %s30, %s31
      %p45 = scmp.eq.s32.totalorder %s23, 3
      %p46 = por %p44, %p45
      %p48 = scmp.ne.s32.totalorder %s31, %s47
      %p49 = scmp.eq.s32.totalorder %s23, 0
      %p50 = por %p48, %p49
      %s52 = sadd.s32 %s51, 1
      %p55 = scmp.eq.s32.totalorder %s17, 3
      %p56 = scmp.ne.s32.totalorder %s51, %s53
      %p57 = scmp.eq.s32.totalorder %s17, 0
      %p58 = por %p56, %p57
      %p59 = scmp.ne.s32.totalorder %s51, %s53
      %p60 = scmp.eq.s32.totalorder %s22, 3
      %p61 = por %p59, %p60
      %p62 = scmp.ne.s32.totalorder %s53, %s54
      %p63 = scmp.eq.s32.totalorder %s22, 0
      %p64 = por %p62, %p63
      %p65 = scmp.ne.s32.totalorder %s53, %s54
      %p66 = scmp.eq.s32.totalorder %s23, 3
      %p67 = por %p65, %p66
      %p69 = scmp.ne.s32.totalorder %s54, %s68
      %p70 = scmp.eq.s32.totalorder %s23, 0
      %p71 = por %p69, %p70
      %s73 = sadd.s32 %s72, 1
      %p76 = scmp.eq.s32.totalorder %s17, 3
      %p77 = scmp.ne.s32.totalorder %s72, %s74
      %p78 = scmp.eq.s32.totalorder %s17, 0
      %p79 = por %p77, %p78
      %p80 = scmp.ne.s32.totalorder %s72, %s74
      %p81 = scmp.eq.s32.totalorder %s22, 3
      %p82 = por %p80, %p81
      %p83 = scmp.ne.s32.totalorder %s74, %s75
      %p84 = scmp.eq.s32.totalorder %s22, 0
      %p85 = por %p83, %p84
      %p86 = scmp.ne.s32.totalorder %s74, %s75
      %p87 = scmp.eq.s32.totalorder %s23, 3
      %p88 = por %p86, %p87
      %p90 = scmp.ne.s32.totalorder %s75, %s89
      %p91 = scmp.eq.s32.totalorder %s23, 0
      %p92 = por %p90, %p91
      %s94 = sadd.s32 %s93, 1
      %p97 = scmp.eq.s32.totalorder %s17, 3
      %p98 = scmp.ne.s32.totalorder %s93, %s95
      %p99 = scmp.eq.s32.totalorder %s17, 0
      %p100 = por %p98, %p99
      %p101 = scmp.ne.s32.totalorder %s93, %s95
      %p102 = scmp.eq.s32.totalorder %s22, 3
      %p103 = por %p101, %p102
      %p104 = scmp.ne.s32.totalorder %s95, %s96
      %p105 = scmp.eq.s32.totalorder %s22, 0
      %p106 = por %p104, %p105
      %p107 = scmp.ne.s32.totalorder %s95, %s96
      %p108 = scmp.eq.s32.totalorder %s23, 3
      %p109 = por %p107, %p108
      %p111 = scmp.ne.s32.totalorder %s96, %s110
      %p112 = scmp.eq.s32.totalorder %s23, 0
      %p113 = por %p111, %p112
      %s114 = ssub.s32 %s17, %s24
      %p115 = scmp.eq.s32.totalorder %s114, 0
      %s117 = sadd.s32 %s116, 1
      %s118 = scalar_select %p115, %s116, %s117
      %p121 = pneg %p115
      %p122 = scmp.eq.s32.totalorder %s17, 3
      %p123 = por %p121, %p122
      %p124 = scmp.ne.s32.totalorder %s116, %s119
      %p125 = scmp.eq.s32.totalorder %s17, 0
      %p126 = por %p124, %p125
      %p127 = scmp.ne.s32.totalorder %s116, %s119
      %p128 = scmp.eq.s32.totalorder %s22, 3
      %p129 = por %p127, %p128
      %p130 = scmp.ne.s32.totalorder %s119, %s120
      %p131 = scmp.eq.s32.totalorder %s22, 0
      %p132 = por %p130, %p131
      %p133 = scmp.ne.s32.totalorder %s119, %s120
      %p134 = scmp.eq.s32.totalorder %s23, 3
      %p135 = por %p133, %p134
      %p137 = scmp.ne.s32.totalorder %s120, %s136
      %p138 = scmp.eq.s32.totalorder %s23, 0
      %p139 = por %p137, %p138
      %s140 = ssub.s32 %s17, %s24
      %p141 = scmp.eq.s32.totalorder %s140, 0
      %s143 = sadd.s32 %s142, 1
      %s144 = scalar_select %p141, %s142, %s143
      %p147 = pneg %p141
      %p148 = scmp.eq.s32.totalorder %s17, 3
      %p149 = por %p147, %p148
      %p150 = scmp.ne.s32.totalorder %s142, %s145
      %p151 = scmp.eq.s32.totalorder %s17, 0
      %p152 = por %p150, %p151
      %p153 = scmp.ne.s32.totalorder %s142, %s145
      %p154 = scmp.eq.s32.totalorder %s22, 3
      %p155 = por %p153, %p154
      %p156 = scmp.ne.s32.totalorder %s145, %s146
      %p157 = scmp.eq.s32.totalorder %s22, 0
      %p158 = por %p156, %p157
      %p159 = scmp.ne.s32.totalorder %s145, %s146
      %p160 = scmp.eq.s32.totalorder %s23, 3
      %p161 = por %p159, %p160
      %p163 = scmp.ne.s32.totalorder %s146, %s162
      %p164 = scmp.eq.s32.totalorder %s23, 0
      %p165 = por %p163, %p164
      %p166 = scmp.le.s32.totalorder 1, %s17
      %p167 = scmp.lt.s32.totalorder %s17, 5
      %p168 = pnand %p166, %p167
      %p169 = pneg %p168
      // Predicated region
      $region9: #{tpu_custom_call.1} parent=5 // pred_check
        _
      $region10: #{tpu_custom_call.1} parent=5 // pred_check_branch
        %171 = sbr.rel (%p168) target = $region12
      $region11: #{tpu_custom_call.1} parent=5 // pred_region
        %s172 = ssub.s32 %s17, 1
        // Predicated region
        $region13: #{tpu_custom_call.1} parent=11 // pred_check
          %p173 = pneg %p64
        $region14: #{tpu_custom_call.1} parent=11 // pred_check_branch
          %175 = sbr.rel (%p173) target = $region16
        $region15: #{tpu_custom_call.1} parent=11 // pred_region
          _
        $region16: #{tpu_custom_call.1} parent=11 // pred_fallthru
          _
        // Predicated region
        $region17: #{tpu_custom_call.1} parent=11 // pred_check
          %p176 = pneg %p85
        $region18: #{tpu_custom_call.1} parent=11 // pred_check_branch
          %178 = sbr.rel (%p176) target = $region20
        $region19: #{tpu_custom_call.1} parent=11 // pred_region
          _
        $region20: #{tpu_custom_call.1} parent=11 // pred_fallthru
          _
        // Predicated region
        $region21: #{tpu_custom_call.1} parent=11 // pred_check
          %p179 = pneg %p106
        $region22: #{tpu_custom_call.1} parent=11 // pred_check_branch
          %181 = sbr.rel (%p179) target = $region24
        $region23: #{tpu_custom_call.1} parent=11 // pred_region
          _
        $region24: #{tpu_custom_call.1} parent=11 // pred_fallthru
          _
      $region12: #{tpu_custom_call.1} parent=5 // pred_fallthru
        _
      %p182 = scmp.lt.s32.totalorder %s17, 4
      // Predicated region
      $region25: #{tpu_custom_call.1} parent=5 // pred_check
        %p183 = pneg %p182
      $region26: #{tpu_custom_call.1} parent=5 // pred_check_branch
        %185 = sbr.rel (%p183) target = $region28
      $region27: #{tpu_custom_call.1} parent=5 // pred_region
        // Predicated region
        $region29: #{tpu_custom_call.1} parent=27 // pred_check
          %p186 = pneg %p37
        $region30: #{tpu_custom_call.1} parent=27 // pred_check_branch
          %188 = sbr.rel (%p186) target = $region32
        $region31: #{tpu_custom_call.1} parent=27 // pred_region
          %s189 = sand.u32 %s27, 1
          %s190 = scalar_lea.sflag [#allocation4], %s189
          %s191 = sand.u32 %s27, 1
          %s192 = smul.addr %s191, 8
          %s193 = scalar_lea.vmem [#allocation3], %s192
          %s195 = ssub.s32 128, 128
          %196 = vsyncadd %s190, %s195
          %s197 = smul.addr %s17, 128
          %s198 = scalar_lea.hbm %s0, %s197
          %s200 = sshll.u32 %s193, 4
          %s201 = int_to_ptr.vmem [resolvable:$true] %s200
          %203 = dma.hbm_to_vmem [thread:$0]  %s198, 128, %s201, %s190
        $region32: #{tpu_custom_call.1} parent=27 // pred_fallthru
          _
      $region28: #{tpu_custom_call.1} parent=5 // pred_fallthru
        _
      %p204 = scmp.le.s32.totalorder 1, %s17
      %p205 = scmp.lt.s32.totalorder %s17, 5
      %p206 = pnand %p204, %p205
      %p207 = pneg %p206
      // Predicated region
      $region33: #{tpu_custom_call.1} parent=5 // pred_check
        _
      $region34: #{tpu_custom_call.1} parent=5 // pred_check_branch
        %209 = sbr.rel (%p206) target = $region36
      $region35: #{tpu_custom_call.1} parent=5 // pred_region
        %s210 = ssub.s32 %s17, 1
        %s211 = sand.u32 %s30, 1
        %s212 = scalar_lea.sflag [#allocation4], %s211
        %s213 = sand.u32 %s30, 1
        %s214 = smul.addr %s213, 8
        %s215 = scalar_lea.vmem [#allocation3], %s214
        // Predicated region
        $region37: #{tpu_custom_call.1} parent=35 // pred_check
          %p216 = pneg %p43
        $region38: #{tpu_custom_call.1} parent=35 // pred_check_branch
          %218 = sbr.rel (%p216) target = $region40
        $region39: #{tpu_custom_call.1} parent=35 // pred_region
          %219 = dma.done %s212, 128
        $region40: #{tpu_custom_call.1} parent=35 // pred_fallthru
          _
        %s220 = sand.u32 %s30, 1
        %s221 = scalar_lea.sflag [#allocation4], %s220
        %s222 = sand.u32 %s30, 1
        %s223 = smul.addr %s222, 8
        %s224 = scalar_lea.vmem [#allocation3], %s223
        %p225 = pneg %p43
        %p226 = pneg %p40
        %p227 = pneg %p64
        %p228 = pneg %p61
        %p229 = pneg %p85
        %p230 = pneg %p82
        %p231 = pneg %p106
        %p232 = pneg %p103
        %p233 = pneg %p132
        %p234 = pneg %p129
        %p235 = scmp.lt.s32.totalorder %s22, 3
        %s236 = scalar_select %p235, %s22, 3
        %s237 = smul.addr %s236, 8
        %s238 = scalar_lea.vmem %s4, %s237
        %p239 = pneg %p158
        %p240 = pneg %p155
        %p241 = scmp.lt.s32.totalorder %s22, 3
        %s242 = scalar_select %p241, %s22, 3
        %s243 = scalar_lea.vmem %s5, %s242
        %p244 = scmp.lt.s32.totalorder %s22, 3
        %s245 = scalar_select %p244, %s22, 3
        %s246 = smul.addr %s245, 8
        %s247 = scalar_lea.vmem %s4, %s246
        %p248 = scmp.lt.s32.totalorder %s22, 3
        %s249 = scalar_select %p248, %s22, 3
        %s250 = scalar_lea.vmem %s5, %s249
        %v251 = vld [vmem:[%s215] sm:$0xff]
        %v252 = vld [vmem:[%s1] sm:$0xf]
        %v253 = vld [vmem:[%s2] sm:$0x1]
        %v255 = vlaneseq
        %v256 = vshrl.u32 %v255, 7
        %v257 = vsub.s32 0, %v256
        %v258 = vrot.slane %v253, %v257
        %vm260 = vcmask 261120
        %v262 = vsel %vm260, %v251, 0
        %v265 = vsel %vm260, %v252, 0
        %267 = vmatprep.subr.mxu0 0.0
        %268 = vmatpush1.xpose.msra.mxu0 %v265
        %269 = vmatprep.subr.mxu0 0.0
        %270 = vmatpush1.xpose.msra.mxu0 0.0
        %271 = vmatprep.subr.mxu0 0.0
        %272 = vmatpush1.xpose.msra.mxu0 0.0
        %273 = vmatprep.subr.mxu0 0.0
        %274 = vmatpush1.xpose.msra.mxu0 0.0
        %275 = vmatprep.subr.mxu0 0.0
        %276 = vmatpush1.xpose.msra.mxu0 0.0
        %277 = vmatprep.subr.mxu0 0.0
        %278 = vmatpush1.xpose.msra.mxu0 0.0
        %279 = vmatprep.subr.mxu0 0.0
        %280 = vmatpush1.xpose.msra.mxu0 0.0
        %281 = vmatprep.subr.mxu0 0.0
        %282 = vmatpush1.xpose.msra.mxu0 0.0
        %283 = vmatprep.subr.mxu0 0.0
        %284 = vmatpush1.xpose.msra.mxu0 0.0
        %285 = vmatprep.subr.mxu0 0.0
        %286 = vmatpush1.xpose.msra.mxu0 0.0
        %287 = vmatprep.subr.mxu0 0.0
        %288 = vmatpush1.xpose.msra.mxu0 0.0
        %289 = vmatprep.subr.mxu0 0.0
        %290 = vmatpush1.xpose.msra.mxu0 0.0
        %291 = vmatprep.subr.mxu0 0.0
        %292 = vmatpush1.xpose.msra.mxu0 0.0
        %293 = vmatprep.subr.mxu0 0.0
        %294 = vmatpush1.xpose.msra.mxu0 0.0
        %295 = vmatprep.subr.mxu0 0.0
        %296 = vmatpush1.xpose.msra.mxu0 0.0
        %297 = vmatprep.subr.mxu0 0.0
        %298 = vmatpush1.xpose.msra.mxu0 0.0
        %299 = vmatprep.subr.mxu0 0.0
        %300 = vmatpush1.xpose.msra.mxu0 0.0
        %301 = vmatprep.subr.mxu0 0.0
        %302 = vmatpush1.xpose.msra.mxu0 0.0
        %303 = vmatprep.subr.mxu0 0.0
        %304 = vmatpush1.xpose.msra.mxu0 0.0
        %305 = vmatprep.subr.mxu0 0.0
        %306 = vmatpush1.xpose.msra.mxu0 0.0
        %307 = vmatprep.subr.mxu0 0.0
        %308 = vmatpush1.xpose.msra.mxu0 0.0
        %309 = vmatprep.subr.mxu0 0.0
        %310 = vmatpush1.xpose.msra.mxu0 0.0
        %311 = vmatprep.subr.mxu0 0.0
        %312 = vmatpush1.xpose.msra.mxu0 0.0
        %313 = vmatprep.subr.mxu0 0.0
        %314 = vmatpush1.xpose.msra.mxu0 0.0
        %315 = vmatprep.subr.mxu0 0.0
        %316 = vmatpush1.xpose.msra.mxu0 0.0
        %317 = vmatprep.subr.mxu0 0.0
        %318 = vmatpush1.xpose.msra.mxu0 0.0
        %319 = vmatprep.subr.mxu0 0.0
        %320 = vmatpush1.xpose.msra.mxu0 0.0
        %321 = vmatprep.subr.mxu0 0.0
        %322 = vmatpush1.xpose.msra.mxu0 0.0
        %323 = vmatprep.subr.mxu0 0.0
        %324 = vmatpush1.xpose.msra.mxu0 0.0
        %325 = vmatprep.subr.mxu0 0.0
        %326 = vmatpush1.xpose.msra.mxu0 0.0
        %327 = vmatprep.subr.mxu0 0.0
        %328 = vmatpush1.xpose.msra.mxu0 0.0
        %329 = vmatprep.subr.mxu0 0.0
        %330 = vmatpush1.xpose.msra.mxu0 0.0
        %331 = vmatprep.mubr.f32.mxu0 0.0
        %332 = vmatmul.mubr.f32.gmra.mrb[0].mxu0 %v262
        %v333 = vpop.f32.mrb[0].mxu0
        %v334 = vadd.f32 %v258, %v333
        %v335 = vpop.f32.mrb[0].mxu0
        %336 = vdwg.mxu0
        %vm337 = vcmask 31744
        %338 = vst.msk [vmem:[%s247] sm:$0xff] %vm337, %v334
        %v339 = vld [vmem:[#allocation2] sm:$0x1]
        %v340 = vsub.f32 0.0, %v339
        %v341 = vmul.f32 %v340, 1.442695
        %v342 = vpow.pop %v341
        %v343 = vadd.f32 %v342, 1.0
        %v344 = vrcp.pop %v343
        %v345 = vmul.f32 1.0, %v344
        %v346 = vsel %vm337, %v334, -inf
        %347 = vmax.xlane.f32.xlu0 %v346
        %v348 = vpop.xlane.xlu0 %347
        %v349 = vrot.slane %v348, 4
        %v350 = vmax.f32 %v348, %v349
        %v351 = vrot.slane %v350, 2
        %v352 = vmax.f32 %v350, %v351
        %v353 = vrot.slane %v352, 1
        %v354 = vmax.f32 %v352, %v353
        %v355 = vsel %vm337, %v334, 0.0
        %356 = vadd.xlane.f32.xlu0 %v355
        %v357 = vpop.xlane.xlu0 %356
        %v358 = vrot.slane %v357, 4
        %v359 = vadd.f32 %v357, %v358
        %v360 = vrot.slane %v359, 2
        %v361 = vadd.f32 %v359, %v360
        %v362 = vrot.slane %v361, 1
        %v363 = vadd.f32 %v361, %v362
        %v364 = vmul.f32 %v363, 0.03125
        %v365 = vmul.f32 %v345, %v354
        %v366 = vsub.f32 1.0, %v345
        %v367 = vmul.f32 %v366, %v364
        %v368 = vadd.f32 %v365, %v367
        %vm369 = vcmask 0
        %370 = vst.msk [vmem:[%s250] sm:$0x1] %vm369, %v368
        %p371 = scmp.lt.s32.totalorder %s22, 3
        %s372 = scalar_select %p371, %s22, 3
        %s373 = smul.addr %s372, 8
        %s374 = scalar_lea.vmem %s4, %s373
        %p375 = scmp.lt.s32.totalorder %s22, 3
        %s376 = scalar_select %p375, %s22, 3
        %s377 = scalar_lea.vmem %s5, %s376
        // Predicated region
        $region41: #{tpu_custom_call.1} parent=35 // pred_check
          %p378 = pneg %p129
        $region42: #{tpu_custom_call.1} parent=35 // pred_check_branch
          %380 = sbr.rel (%p378) target = $region44
        $region43: #{tpu_custom_call.1} parent=35 // pred_region
          _
        $region44: #{tpu_custom_call.1} parent=35 // pred_fallthru
          _
        // Predicated region
        $region45: #{tpu_custom_call.1} parent=35 // pred_check
          %p381 = pneg %p155
        $region46: #{tpu_custom_call.1} parent=35 // pred_check_branch
          %383 = sbr.rel (%p381) target = $region48
        $region47: #{tpu_custom_call.1} parent=35 // pred_region
          _
        $region48: #{tpu_custom_call.1} parent=35 // pred_fallthru
          _
      $region36: #{tpu_custom_call.1} parent=5 // pred_fallthru
        _
      %p384 = scmp.le.s32.totalorder 2, %s17
      // Predicated region
      $region49: #{tpu_custom_call.1} parent=5 // pred_check
        %p385 = pneg %p384
      $region50: #{tpu_custom_call.1} parent=5 // pred_check_branch
        %387 = sbr.rel (%p385) target = $region52
      $region51: #{tpu_custom_call.1} parent=5 // pred_region
        %s388 = ssub.s32 %s17, 2
        // Predicated region
        $region53: #{tpu_custom_call.1} parent=51 // pred_check
          %p389 = pneg %p135
        $region54: #{tpu_custom_call.1} parent=51 // pred_check_branch
          %391 = sbr.rel (%p389) target = $region56
        $region55: #{tpu_custom_call.1} parent=51 // pred_region
          %p392 = scmp.lt.s32.totalorder %s23, 3
          %s393 = scalar_select %p392, %s23, 3
          %s394 = smul.addr %s393, 8
          %s395 = scalar_lea.vmem %s4, %s394
        $region56: #{tpu_custom_call.1} parent=51 // pred_fallthru
          _
        // Predicated region
        $region57: #{tpu_custom_call.1} parent=51 // pred_check
          %p396 = pneg %p161
        $region58: #{tpu_custom_call.1} parent=51 // pred_check_branch
          %398 = sbr.rel (%p396) target = $region60
        $region59: #{tpu_custom_call.1} parent=51 // pred_region
          %p399 = scmp.lt.s32.totalorder %s23, 3
          %s400 = scalar_select %p399, %s23, 3
          %s401 = scalar_lea.vmem %s5, %s400
        $region60: #{tpu_custom_call.1} parent=51 // pred_fallthru
          _
      $region52: #{tpu_custom_call.1} parent=5 // pred_fallthru
        _
    $region6: #{tpu_custom_call.1} parent=1 // loop_footer
      %s21 = sadd.s32 1, %s17
    $region7: #{tpu_custom_call.1} parent=1 // loop_footer_branch
      %16 = sbr.rel target = $region3
    $region8: #{tpu_custom_call.1} parent=1 // loop_exit
      _
    %402 = vsyncpa [#allocation4], 1
    %s403 = scalar_lea.sflag [#allocation4], 1
    %404 = vsyncpa %s403, 1

</llo_original>
